<compile_context>
chip_gen: v6e
topology: v6e:2x2x1
jax: 0.10.0
libtpu: 0.0.40
codegen_flags: <defaults>
</compile_context>

<pallas_src>
import functools

import numpy as np
import jax
import jax.numpy as jnp
from jax.experimental import pallas as pl
from jax.experimental.pallas import tpu as pltpu


_APR = 128  # anchors packed per lane-row in the lane-dense fast path


# --------------------------------------------------------------------------- #
# Kernels
# --------------------------------------------------------------------------- #
def _wl1_flat_kernel(*refs, has_cw, has_w):
    """Lane-dense fast path. Blocks are (1, TR, L) with L = _APR * C."""
    refs = list(refs)
    x_ref = refs.pop(0)                          # (1, TR, L)
    t_ref = refs.pop(0)                          # (1, TR, L)
    cw_ref = refs.pop(0) if has_cw else None     # (1, L)   tiled code weights
    w_ref = refs.pop(0) if has_w else None       # (1, TR, _APR) per-anchor weights
    e_ref = refs.pop(0) if has_w else None       # (_APR, L) 0/1 lane-expansion matrix
    out_ref = refs.pop(0)                        # (1, TR, L)

    x = x_ref[0]                                 # (TR, L)
    t = t_ref[0]
    t = jnp.where(jnp.isnan(t), x, t)            # nan targets -> zero diff
    d = x - t
    if has_cw:
        d = d * cw_ref[...]                      # (1, L) broadcast over rows (sublanes)
    loss = jnp.abs(d)
    if has_w:
        # Expand (TR, _APR) anchor weights to (TR, L) lanes with one small MXU
        # matmul against a constant 0/1 matrix (exactly one 1 per column, so the
        # result is bit-exact). Avoids cross-lane VPU/XLU shuffles and avoids
        # materializing repeated weights in HBM.
        w_exp = jnp.dot(w_ref[0], e_ref[...], preferred_element_type=jnp.float32)
        loss = loss * w_exp.astype(loss.dtype)
    out_ref[0] = loss.astype(out_ref.dtype)


def _wl1_rowmajor_kernel(*refs, has_cw, has_w):
    """Fallback path (codes on lanes). Blocks are (1, TA, C)."""
    refs = list(refs)
    x_ref = refs.pop(0)                          # (1, TA, C)
    t_ref = refs.pop(0)                          # (1, TA, C)
    cw_ref = refs.pop(0) if has_cw else None     # (1, C)
    w_ref = refs.pop(0) if has_w else None       # (1, TA, 1)
    out_ref = refs.pop(0)                        # (1, TA, C)

    x = x_ref[0]
    t = t_ref[0]
    t = jnp.where(jnp.isnan(t), x, t)
    d = x - t
    if has_cw:
        d = d * cw_ref[...]                      # (1, C) broadcasts over anchors
    loss = jnp.abs(d)
    if has_w:
        loss = loss * w_ref[0]                   # (TA, 1) broadcasts over codes
    out_ref[0] = loss.astype(out_ref.dtype)


# --------------------------------------------------------------------------- #
# Wrappers
# --------------------------------------------------------------------------- #
def _pick_row_tile(rows, row_bytes):
    """Pick a row-tile targeting ~1 MiB input blocks; multiple of 8 (or full)."""
    target = max(8, min(512, (1 << 20) // max(row_bytes, 1)))
    target -= target % 8
    target = max(target, 8)
    if rows <= target:
        return rows                      # full extent (always legal)
    for t in range(target, 7, -8):
        if rows % t == 0:
            return t                     # exact tiling, no ragged block
    return target                        # ragged last block (stores masked by Pallas)


def _weighted_l1_fast(inp, target, weights, code_weights):
    B, A, C = inp.shape
    rows = A // _APR
    L = _APR * C

    x = inp.reshape(B, rows, L)          # free reshapes (contiguous memory)
    t = target.reshape(B, rows, L)
    TR = _pick_row_tile(rows, L * x.dtype.itemsize)
    grid = (B, pl.cdiv(rows, TR))

    has_cw = code_weights is not None
    has_w = weights is not None

    in_specs = [
        pl.BlockSpec((1, TR, L), lambda b, r: (b, r, 0)),   # input
        pl.BlockSpec((1, TR, L), lambda b, r: (b, r, 0)),   # target
    ]
    args = [x, t]

    if has_cw:
        cw = jnp.asarray(code_weights, dtype=inp.dtype).reshape(1, C)
        cw_tiled = jnp.tile(cw, (1, _APR))                  # (1, L) tiny constant
        in_specs.append(pl.BlockSpec((1, L), lambda b, r: (0, 0)))
        args.append(cw_tiled)
    if has_w:
        w = weights.astype(jnp.float32).reshape(B, rows, _APR)   # free reshape
        # E[i, j] = 1 if j // C == i else 0  -> lane expansion by factor C
        e = (jnp.arange(L, dtype=jnp.int32)[None, :] // C
             == jnp.arange(_APR, dtype=jnp.int32)[:, None]).astype(jnp.float32)
        in_specs.append(pl.BlockSpec((1, TR, _APR), lambda b, r: (b, r, 0)))
        in_specs.append(pl.BlockSpec((_APR, L), lambda b, r: (0, 0)))
        args += [w, e]

    kernel = functools.partial(_wl1_flat_kernel, has_cw=has_cw, has_w=has_w)
    out = pl.pallas_call(
        kernel,
        out_shape=jax.ShapeDtypeStruct((B, rows, L), inp.dtype),
        grid_spec=pltpu.PrefetchScalarGridSpec(
            num_scalar_prefetch=0,
            grid=grid,
            in_specs=in_specs,
            out_specs=pl.BlockSpec((1, TR, L), lambda b, r: (b, r, 0)),
        ),
        compiler_params=pltpu.CompilerParams(
            dimension_semantics=("parallel", "parallel")),
    )(*args)
    return out.reshape(B, A, C)


def _weighted_l1_fallback(inp, target, weights, code_weights, anchors_per_tile=512):
    B, A, C = inp.shape
    TA = min(A, anchors_per_tile)
    if A % TA != 0 or (TA % 8 != 0 and TA != A):
        TA = A
    grid = (B, pl.cdiv(A, TA))

    has_cw = code_weights is not None
    has_w = weights is not None

    in_specs = [
        pl.BlockSpec((1, TA, C), lambda b, a: (b, a, 0)),
        pl.BlockSpec((1, TA, C), lambda b, a: (b, a, 0)),
    ]
    args = [inp, target]

    if has_cw:
        cw = jnp.asarray(code_weights, dtype=inp.dtype).reshape(1, C)
        in_specs.append(pl.BlockSpec((1, C), lambda b, a: (0, 0)))
        args.append(cw)
    if has_w:
        w3 = weights.astype(inp.dtype).reshape(B, A, 1)       # free reshape
        in_specs.append(pl.BlockSpec((1, TA, 1), lambda b, a: (b, a, 0)))
        args.append(w3)

    kernel = functools.partial(_wl1_rowmajor_kernel, has_cw=has_cw, has_w=has_w)
    return pl.pallas_call(
        kernel,
        out_shape=jax.ShapeDtypeStruct((B, A, C), inp.dtype),
        grid_spec=pltpu.PrefetchScalarGridSpec(
            num_scalar_prefetch=0,
            grid=grid,
            in_specs=in_specs,
            out_specs=pl.BlockSpec((1, TA, C), lambda b, a: (b, a, 0)),
        ),
        compiler_params=pltpu.CompilerParams(
            dimension_semantics=("parallel", "parallel")),
    )(*args)


def weighted_l1_loss(inp, target, weights=None, code_weights=None):
    """Pallas TPU implementation of WeightedL1Loss.forward (no reduction)."""
    B, A, C = inp.shape
    assert target.shape == (B, A, C)
    if weights is not None:
        assert weights.shape == (B, A)

    if A % _APR == 0:
        return _weighted_l1_fast(inp, target, weights, code_weights)
    return _weighted_l1_fallback(inp, target, weights, code_weights)


def _reference(inp, target, weights=None, code_weights=None):
    # pure-JAX mirror of the PyTorch forward
    t = jnp.where(jnp.isnan(target), inp, target)
    d = inp - t
    if code_weights is not None:
        d = d * jnp.asarray(code_weights, dtype=inp.dtype).reshape(1, 1, -1)
    loss = jnp.abs(d)
    if weights is not None:
        loss = loss * weights[..., None]
    return loss


if __name__ == "__main__":
    key = jax.random.PRNGKey(0)
    k1, k2, k3, k4, k5, k6 = jax.random.split(key, 6)
    code_weights = [1.0, 1.0, 1.0, 1.0, 1.0, 0.5, 2.0]

    # ---- lane-dense fast path (A % 128 == 0) ----
    B, A, C = 2, 1024, 7
    inp = jax.random.normal(k1, (B, A, C), dtype=jnp.float32)
    tgt = jax.random.normal(k2, (B, A, C), dtype=jnp.float32)
    tgt = tgt.at[0, 3, 2].set(jnp.nan).at[1, 777, :].set(jnp.nan)
    w = jax.random.uniform(k3, (B, A), dtype=jnp.float32)

    out = jax.block_until_ready(
        weighted_l1_loss(inp, tgt, weights=w, code_weights=code_weights))
    ref = _reference(inp, tgt, weights=w, code_weights=code_weights)
    assert out.shape == (B, A, C)
    assert np.allclose(np.asarray(out), np.asarray(ref), rtol=1e-6, atol=1e-6)

    # fast path, no optional args
    out2 = jax.block_until_ready(weighted_l1_loss(inp, tgt))
    assert np.allclose(np.asarray(out2), np.asarray(_reference(inp, tgt)),
                       rtol=1e-6, atol=1e-6)

    # ---- fallback path (A not a multiple of 128) ----
    B2, A2 = 2, 120
    inp2 = jax.random.normal(k4, (B2, A2, C), dtype=jnp.float32)
    tgt2 = jax.random.normal(k5, (B2, A2, C), dtype=jnp.float32)
    tgt2 = tgt2.at[1, 10, :].set(jnp.nan)
    w2 = jax.random.uniform(k6, (B2, A2), dtype=jnp.float32)

    out3 = jax.block_until_ready(
        weighted_l1_loss(inp2, tgt2, weights=w2, code_weights=code_weights))
    ref3 = _reference(inp2, tgt2, weights=w2, code_weights=code_weights)
    assert np.allclose(np.asarray(out3), np.asarray(ref3), rtol=1e-6, atol=1e-6)

    print("KERNEL_OK")
</pallas_src>

<mosaic_0001>
module attributes {stable_mosaic.version = 11 : i64} {
  func.func @_wl1_flat_kernel(%arg0: i32, %arg1: i32, %arg2: memref<1x8x896xf32, #tpu.memory_space<vmem>>, %arg3: memref<1x8x896xf32, #tpu.memory_space<vmem>>, %arg4: memref<1x896xf32, #tpu.memory_space<vmem>>, %arg5: memref<1x8x128xf32, #tpu.memory_space<vmem>>, %arg6: memref<128x896xf32, #tpu.memory_space<vmem>>, %arg7: memref<1x8x896xf32, #tpu.memory_space<vmem>>) attributes {dimension_semantics = [#tpu.dimension_semantics<parallel>, #tpu.dimension_semantics<parallel>], iteration_bounds = array<i64: 2, 1>, scalar_prefetch = 0 : i64, scratch_operands = 0 : i64, tpu.core_type = #tpu.core_type<tc>, window_params = [{transform_indices = @transform_0, window_bounds = array<i64: 1, 8, 896>}, {transform_indices = @transform_1, window_bounds = array<i64: 1, 8, 896>}, {pipeline_mode = #tpu.pipeline_mode<synchronous>, transform_indices = @transform_2, window_bounds = array<i64: 1, 896>}, {transform_indices = @transform_3, window_bounds = array<i64: 1, 8, 128>}, {pipeline_mode = #tpu.pipeline_mode<synchronous>, transform_indices = @transform_4, window_bounds = array<i64: 128, 896>}, {transform_indices = @transform_5, window_bounds = array<i64: 1, 8, 896>}]} {
    %c0 = arith.constant 0 : index
    %c0_0 = arith.constant 0 : index
    %c0_1 = arith.constant 0 : index
    %0 = vector.load %arg2[%c0, %c0_0, %c0_1] : memref<1x8x896xf32, #tpu.memory_space<vmem>>, vector<1x8x896xf32>
    %1 = vector.shape_cast %0 : vector<1x8x896xf32> to vector<8x896xf32>
    %c0_2 = arith.constant 0 : index
    %c0_3 = arith.constant 0 : index
    %c0_4 = arith.constant 0 : index
    %2 = vector.load %arg3[%c0_2, %c0_3, %c0_4] : memref<1x8x896xf32, #tpu.memory_space<vmem>>, vector<1x8x896xf32>
    %3 = vector.shape_cast %2 : vector<1x8x896xf32> to vector<8x896xf32>
    %4 = arith.cmpf one, %3, %3 : vector<8x896xf32>
    %5 = arith.select %4, %1, %3 : vector<8x896xi1>, vector<8x896xf32>
    %6 = arith.subf %1, %5 : vector<8x896xf32>
    %c0_5 = arith.constant 0 : index
    %c0_6 = arith.constant 0 : index
    %7 = vector.load %arg4[%c0_5, %c0_6] : memref<1x896xf32, #tpu.memory_space<vmem>>, vector<1x896xf32>
    %8 = vector.broadcast %7 : vector<1x896xf32> to vector<8x896xf32>
    %9 = arith.mulf %6, %8 : vector<8x896xf32>
    %10 = math.absf %9 : vector<8x896xf32>
    %c0_7 = arith.constant 0 : index
    %c0_8 = arith.constant 0 : index
    %c0_9 = arith.constant 0 : index
    %11 = vector.load %arg5[%c0_7, %c0_8, %c0_9] : memref<1x8x128xf32, #tpu.memory_space<vmem>>, vector<1x8x128xf32>
    %12 = vector.shape_cast %11 : vector<1x8x128xf32> to vector<8x128xf32>
    %c0_10 = arith.constant 0 : index
    %c0_11 = arith.constant 0 : index
    %13 = vector.load %arg6[%c0_10, %c0_11] : memref<128x896xf32, #tpu.memory_space<vmem>>, vector<128x896xf32>
    %cst = arith.constant dense<0.000000e+00> : vector<8x896xf32>
    %14 = tpu.matmul %12, %13, %cst {dimension_numbers = #tpu.dot_dimension_numbers<[1], [0], [0], [1], [0, 0, 1, 1], [], []>} : vector<8x128xf32>, vector<128x896xf32>, vector<8x896xf32> -> vector<8x896xf32>
    %15 = arith.mulf %10, %14 : vector<8x896xf32>
    %c0_12 = arith.constant 0 : index
    %c0_13 = arith.constant 0 : index
    %c0_14 = arith.constant 0 : index
    %16 = vector.load %arg7[%c0_12, %c0_13, %c0_14] : memref<1x8x896xf32, #tpu.memory_space<vmem>>, vector<1x8x896xf32>
    %17 = vector.shape_cast %16 : vector<1x8x896xf32> to vector<8x896xf32>
    %18 = vector.shape_cast %15 : vector<8x896xf32> to vector<1x8x896xf32>
    tpu.vector_store %arg7[%c0_12, %c0_13, %c0_14], %18 {strides = array<i32>} : memref<1x8x896xf32, #tpu.memory_space<vmem>>, vector<1x8x896xf32>,
    return
  }
  func.func @transform_0(%arg0: i32, %arg1: i32) -> (i32, i32, i32) {
    %c0_i32 = arith.constant 0 : i32
    %c0_i32_0 = arith.constant 0 : i32
    return %arg0, %arg1, %c0_i32 : i32, i32, i32
  }
  func.func @transform_1(%arg0: i32, %arg1: i32) -> (i32, i32, i32) {
    %c0_i32 = arith.constant 0 : i32
    %c0_i32_0 = arith.constant 0 : i32
    return %arg0, %arg1, %c0_i32 : i32, i32, i32
  }
  func.func @transform_2(%arg0: i32, %arg1: i32) -> (i32, i32) {
    %c0_i32 = arith.constant 0 : i32
    %c0_i32_0 = arith.constant 0 : i32
    %c0_i32_1 = arith.constant 0 : i32
    return %c0_i32, %c0_i32_0 : i32, i32
  }
  func.func @transform_3(%arg0: i32, %arg1: i32) -> (i32, i32, i32) {
    %c0_i32 = arith.constant 0 : i32
    %c0_i32_0 = arith.constant 0 : i32
    return %arg0, %arg1, %c0_i32 : i32, i32, i32
  }
  func.func @transform_4(%arg0: i32, %arg1: i32) -> (i32, i32) {
    %c0_i32 = arith.constant 0 : i32
    %c0_i32_0 = arith.constant 0 : i32
    %c0_i32_1 = arith.constant 0 : i32
    return %c0_i32, %c0_i32_0 : i32, i32
  }
  func.func @transform_5(%arg0: i32, %arg1: i32) -> (i32, i32, i32) {
    %c0_i32 = arith.constant 0 : i32
    %c0_i32_0 = arith.constant 0 : i32
    return %arg0, %arg1, %c0_i32 : i32, i32, i32
  }
}

</mosaic_0001>

<llo_original>
// kernel: tpu_custom_call.1
$region0: #{tpu_custom_call.1}
  #allocation0 [shape = 'u32[]', space=smem, size = 0x4, offset = 0x4, fixed_abs, tag = 'smem constant byte address 0x4 - core index']
  #allocation1 [shape = 'u32[144,128]{1,0:T(1,128)}', space=vmem, size = 0x12000, scoped, tag = 'internal scratch']
  %s0 = inlined_call_operand.hbm [shape: f32[2,8,896], index: 0, kind: input, shape index: {}]
  %s1 = inlined_call_operand.hbm [shape: f32[2,8,896], index: 1, kind: input, shape index: {}]
  %s2 = inlined_call_operand.hbm [shape: f32[1,896], index: 2, kind: input, shape index: {}]
  %s3 = inlined_call_operand.hbm [shape: f32[2,8,128], index: 3, kind: input, shape index: {}]
  %s4 = inlined_call_operand.hbm [shape: f32[128,896], index: 4, kind: input, shape index: {}]
  %s5 = inlined_call_operand.hbm [shape: f32[2,8,896], index: 5, kind: output, shape index: {}]
  %s6 = sld [smem:[#allocation0]]
  $region73: #{tpu_custom_call.1} parent=0
    _
  %s8 = ssub.s32 1, %s6
  %s9 = scalar_select 0, %s8, %s6
  $region1: #{tpu_custom_call.1} parent=0
    #allocation2 [shape = 'u8[57344]{0}', space=vmem, size = 0xe000, scoped, tag = 'input window, operand 0']
    #allocation3 [shape = 's32[2]{0}', space=sflag, size = 0x8, scoped, tag = 'scoped memory for tpu_custom_call.1']
    #allocation4 [shape = 's32[2]{0}', space=sflag, size = 0x8, scoped, tag = 'scoped memory for tpu_custom_call.1']
    #allocation5 [shape = 'u8[57344]{0}', space=vmem, size = 0xe000, scoped, tag = 'input window, operand 1']
    #allocation6 [shape = 's32[2]{0}', space=sflag, size = 0x8, scoped, tag = 'scoped memory for tpu_custom_call.1']
    #allocation7 [shape = 'u8[3584]{0}', space=vmem, size = 0x1000, scoped, tag = 'input window, operand 2, single buffered']
    #allocation8 [shape = 'u8[8192]{0}', space=vmem, size = 0x2000, scoped, tag = 'input window, operand 3']
    #allocation9 [shape = 's32[2]{0}', space=sflag, size = 0x8, scoped, tag = 'scoped memory for tpu_custom_call.1']
    #allocation10 [shape = 'u8[458752]{0}', space=vmem, size = 0x70000, scoped, tag = 'input window, operand 4, single buffered']
    #allocation11 [shape = 'u8[57344]{0}', space=vmem, size = 0xe000, scoped, tag = 'output window, operand 0']
    %10 = vsyncpa [#allocation3], 0
    %s11 = scalar_lea.sflag [#allocation3], 1
    %12 = vsyncpa %s11, 0
    %13 = vsyncpa [#allocation6], 0
    %s14 = scalar_lea.sflag [#allocation6], 1
    %15 = vsyncpa %s14, 0
    %16 = vsyncpa [#allocation9], 0
    %s17 = scalar_lea.sflag [#allocation9], 1
    %18 = vsyncpa %s17, 0
    %19 = vsyncpa [#allocation4], 0
    %s20 = scalar_lea.sflag [#allocation4], 1
    %21 = vsyncpa %s20, 0
    loop: start=0, step=1, limit=4
    $region2: #{tpu_custom_call.1} parent=1 // loop_pre_header
      _
    $region3: #{tpu_custom_call.1} parent=1 // loop_header
      %s23 = sphi 0, %s27
      %p24 = scmp.ge.s32.totalorder %s23, 4
      %s30 = sphi 0, %s42
      %s31 = sphi 0, %s38
      %s32 = sphi 0, %s30
      %s33 = sphi 0, %s31
      %s34 = sphi 0, %s32
      %s35 = sphi 0, %s33
      %s47 = sphi 0, %s49
      %s50 = sphi 0, %s47
      %s51 = sphi 0, %s50
      %s67 = sphi 0, %s51
      %s75 = sphi 0, %s77
      %s78 = sphi 0, %s75
      %s79 = sphi 0, %s78
      %s95 = sphi 0, %s79
      %s99 = sphi 0, %s99
      %s101 = sphi 0, %s99
      %s102 = sphi 0, %s101
      %s116 = sphi 0, %s102
      %s124 = sphi 0, %s126
      %s127 = sphi 0, %s124
      %s128 = sphi 0, %s127
      %s144 = sphi 0, %s128
      %s148 = sphi 0, %s148
      %s150 = sphi 0, %s148
      %s151 = sphi 0, %s150
      %s165 = sphi 0, %s151
      %s173 = sphi 0, %s175
      %s176 = sphi 0, %s173
      %s177 = sphi 0, %s176
      %s193 = sphi 0, %s177
    $region4: #{tpu_custom_call.1} parent=1 // loop_header_branch
      %26 = sbr.rel (%p24) target = $region8
    $region5: #{tpu_custom_call.1} parent=1 // loop_body
      %s28 = ssub.s32 %s23, 1
      %s29 = ssub.s32 %s23, 2
      %s36 = sadd.s32 1, %s31
      %p37 = scmp.ge.s32.totalorder %s36, 1
      %s38 = scalar_select %p37, 0, %s36
      %s39 = sadd.s32 1, %s30
      %s40 = scalar_select %p37, %s39, %s30
      %p41 = scmp.ge.s32.totalorder %s40, 2
      %s42 = scalar_select %p41, 0, %s40
      %s43 = ssub.s32 %s30, %s42
      %s44 = ssub.s32 %s31, %s38
      %s45 = sor.u32 %s43, %s44
      %p46 = scmp.eq.s32.totalorder %s45, 0
      %s48 = sadd.s32 %s47, 1
      %s49 = scalar_select %p46, %s47, %s48
      %p52 = pneg %p46
      %p53 = scmp.eq.s32.totalorder %s23, 1
      %p54 = por %p52, %p53
      %p55 = scmp.ne.s32.totalorder %s47, %s50
      %p56 = scmp.eq.s32.totalorder %s23, 0
      %p57 = por %p55, %p56
      %p58 = scmp.ne.s32.totalorder %s47, %s50
      %p59 = scmp.eq.s32.totalorder %s28, 1
      %p60 = por %p58, %p59
      %p61 = scmp.ne.s32.totalorder %s50, %s51
      %p62 = scmp.eq.s32.totalorder %s28, 0
      %p63 = por %p61, %p62
      %p64 = scmp.ne.s32.totalorder %s50, %s51
      %p65 = scmp.eq.s32.totalorder %s29, 1
      %p66 = por %p64, %p65
      %p68 = scmp.ne.s32.totalorder %s51, %s67
      %p69 = scmp.eq.s32.totalorder %s29, 0
      %p70 = por %p68, %p69
      %s71 = ssub.s32 %s30, %s42
      %s72 = ssub.s32 %s31, %s38
      %s73 = sor.u32 %s71, %s72
      %p74 = scmp.eq.s32.totalorder %s73, 0
      %s76 = sadd.s32 %s75, 1
      %s77 = scalar_select %p74, %s75, %s76
      %p80 = pneg %p74
      %p81 = scmp.eq.s32.totalorder %s23, 1
      %p82 = por %p80, %p81
      %p83 = scmp.ne.s32.totalorder %s75, %s78
      %p84 = scmp.eq.s32.totalorder %s23, 0
      %p85 = por %p83, %p84
      %p86 = scmp.ne.s32.totalorder %s75, %s78
      %p87 = scmp.eq.s32.totalorder %s28, 1
      %p88 = por %p86, %p87
      %p89 = scmp.ne.s32.totalorder %s78, %s79
      %p90 = scmp.eq.s32.totalorder %s28, 0
      %p91 = por %p89, %p90
      %p92 = scmp.ne.s32.totalorder %s78, %s79
      %p93 = scmp.eq.s32.totalorder %s29, 1
      %p94 = por %p92, %p93
      %p96 = scmp.ne.s32.totalorder %s79, %s95
      %p97 = scmp.eq.s32.totalorder %s29, 0
      %p98 = por %p96, %p97
      %s100 = sadd.s32 %s99, 1
      %p103 = scmp.eq.s32.totalorder %s23, 1
      %p104 = scmp.ne.s32.totalorder %s99, %s101
      %p105 = scmp.eq.s32.totalorder %s23, 0
      %p106 = por %p104, %p105
      %p107 = scmp.ne.s32.totalorder %s99, %s101
      %p108 = scmp.eq.s32.totalorder %s28, 1
      %p109 = por %p107, %p108
      %p110 = scmp.ne.s32.totalorder %s101, %s102
      %p111 = scmp.eq.s32.totalorder %s28, 0
      %p112 = por %p110, %p111
      %p113 = scmp.ne.s32.totalorder %s101, %s102
      %p114 = scmp.eq.s32.totalorder %s29, 1
      %p115 = por %p113, %p114
      %p117 = scmp.ne.s32.totalorder %s102, %s116
      %p118 = scmp.eq.s32.totalorder %s29, 0
      %p119 = por %p117, %p118
      %s120 = ssub.s32 %s30, %s42
      %s121 = ssub.s32 %s31, %s38
      %s122 = sor.u32 %s120, %s121
      %p123 = scmp.eq.s32.totalorder %s122, 0
      %s125 = sadd.s32 %s124, 1
      %s126 = scalar_select %p123, %s124, %s125
      %p129 = pneg %p123
      %p130 = scmp.eq.s32.totalorder %s23, 1
      %p131 = por %p129, %p130
      %p132 = scmp.ne.s32.totalorder %s124, %s127
      %p133 = scmp.eq.s32.totalorder %s23, 0
      %p134 = por %p132, %p133
      %p135 = scmp.ne.s32.totalorder %s124, %s127
      %p136 = scmp.eq.s32.totalorder %s28, 1
      %p137 = por %p135, %p136
      %p138 = scmp.ne.s32.totalorder %s127, %s128
      %p139 = scmp.eq.s32.totalorder %s28, 0
      %p140 = por %p138, %p139
      %p141 = scmp.ne.s32.totalorder %s127, %s128
      %p142 = scmp.eq.s32.totalorder %s29, 1
      %p143 = por %p141, %p142
      %p145 = scmp.ne.s32.totalorder %s128, %s144
      %p146 = scmp.eq.s32.totalorder %s29, 0
      %p147 = por %p145, %p146
      %s149 = sadd.s32 %s148, 1
      %p152 = scmp.eq.s32.totalorder %s23, 1
      %p153 = scmp.ne.s32.totalorder %s148, %s150
      %p154 = scmp.eq.s32.totalorder %s23, 0
      %p155 = por %p153, %p154
      %p156 = scmp.ne.s32.totalorder %s148, %s150
      %p157 = scmp.eq.s32.totalorder %s28, 1
      %p158 = por %p156, %p157
      %p159 = scmp.ne.s32.totalorder %s150, %s151
      %p160 = scmp.eq.s32.totalorder %s28, 0
      %p161 = por %p159, %p160
      %p162 = scmp.ne.s32.totalorder %s150, %s151
      %p163 = scmp.eq.s32.totalorder %s29, 1
      %p164 = por %p162, %p163
      %p166 = scmp.ne.s32.totalorder %s151, %s165
      %p167 = scmp.eq.s32.totalorder %s29, 0
      %p168 = por %p166, %p167
      %s169 = ssub.s32 %s30, %s42
      %s170 = ssub.s32 %s31, %s38
      %s171 = sor.u32 %s169, %s170
      %p172 = scmp.eq.s32.totalorder %s171, 0
      %s174 = sadd.s32 %s173, 1
      %s175 = scalar_select %p172, %s173, %s174
      %p178 = pneg %p172
      %p179 = scmp.eq.s32.totalorder %s23, 1
      %p180 = por %p178, %p179
      %p181 = scmp.ne.s32.totalorder %s173, %s176
      %p182 = scmp.eq.s32.totalorder %s23, 0
      %p183 = por %p181, %p182
      %p184 = scmp.ne.s32.totalorder %s173, %s176
      %p185 = scmp.eq.s32.totalorder %s28, 1
      %p186 = por %p184, %p185
      %p187 = scmp.ne.s32.totalorder %s176, %s177
      %p188 = scmp.eq.s32.totalorder %s28, 0
      %p189 = por %p187, %p188
      %p190 = scmp.ne.s32.totalorder %s176, %s177
      %p191 = scmp.eq.s32.totalorder %s29, 1
      %p192 = por %p190, %p191
      %p194 = scmp.ne.s32.totalorder %s177, %s193
      %p195 = scmp.eq.s32.totalorder %s29, 0
      %p196 = por %p194, %p195
      %p197 = scmp.le.s32.totalorder 1, %s23
      %p198 = scmp.lt.s32.totalorder %s23, 3
      %p199 = pnand %p197, %p198
      %p200 = pneg %p199
      // Predicated region
      $region9: #{tpu_custom_call.1} parent=5 // pred_check
        _
      $region10: #{tpu_custom_call.1} parent=5 // pred_check_branch
        %202 = sbr.rel (%p199) target = $region12
      $region11: #{tpu_custom_call.1} parent=5 // pred_region
        %s203 = ssub.s32 %s23, 1
        // Predicated region
        $region13: #{tpu_custom_call.1} parent=11 // pred_check
          %p204 = pneg %p112
        $region14: #{tpu_custom_call.1} parent=11 // pred_check_branch
          %206 = sbr.rel (%p204) target = $region16
        $region15: #{tpu_custom_call.1} parent=11 // pred_region
          %s208 = ssub.s32 112, 112
          %209 = vsyncadd [#allocation6], %s208
          %s211 = sshll.u32 [#allocation7], 4
          %s212 = int_to_ptr.vmem [resolvable:$true] %s211
          %214 = dma.hbm_to_vmem [thread:$0]  %s2, 112, %s212, [#allocation6]
        $region16: #{tpu_custom_call.1} parent=11 // pred_fallthru
          _
        // Predicated region
        $region17: #{tpu_custom_call.1} parent=11 // pred_check
          %p215 = pneg %p161
        $region18: #{tpu_custom_call.1} parent=11 // pred_check_branch
          %217 = sbr.rel (%p215) target = $region20
        $region19: #{tpu_custom_call.1} parent=11 // pred_region
          %s219 = ssub.s32 14336, 14336
          %220 = vsyncadd [#allocation9], %s219
          %s221 = sshll.u32 [#allocation10], 4
          %s222 = int_to_ptr.vmem [resolvable:$true] %s221
          %227 = dma.hbm_to_vmem [thread:$0]  %s4, 14336, %s222, [#allocation9], 896, 896, 56
        $region20: #{tpu_custom_call.1} parent=11 // pred_fallthru
          _
      $region12: #{tpu_custom_call.1} parent=5 // pred_fallthru
        _
      %p228 = scmp.lt.s32.totalorder %s23, 2
      // Predicated region
      $region21: #{tpu_custom_call.1} parent=5 // pred_check
        %p229 = pneg %p228
      $region22: #{tpu_custom_call.1} parent=5 // pred_check_branch
        %231 = sbr.rel (%p229) target = $region24
      $region23: #{tpu_custom_call.1} parent=5 // pred_region
        // Predicated region
        $region25: #{tpu_custom_call.1} parent=23 // pred_check
          %p232 = pneg %p57
        $region26: #{tpu_custom_call.1} parent=23 // pred_check_branch
          %234 = sbr.rel (%p232) target = $region28
        $region27: #{tpu_custom_call.1} parent=23 // pred_region
          %s235 = sand.u32 %s47, 1
          %s236 = scalar_lea.sflag [#allocation3], %s235
          %s237 = sand.u32 %s47, 1
          %s238 = smul.addr %s237, 56
          %s239 = scalar_lea.vmem [#allocation2], %s238
          %s241 = ssub.s32 896, 896
          %242 = vsyncadd %s236, %s241
          %s243 = smul.addr %s31, 7
          %s244 = smul.addr %s30, 7
          %s245 = sadd.s32 %s243, %s244
          %s246 = smul.addr %s245, 128
          %s247 = scalar_lea.hbm %s0, %s246
          %s249 = sshll.u32 %s239, 4
          %s250 = int_to_ptr.vmem [resolvable:$true] %s249
          %252 = dma.hbm_to_vmem [thread:$0]  %s247, 896, %s250, %s236
        $region28: #{tpu_custom_call.1} parent=23 // pred_fallthru
          _
        // Predicated region
        $region29: #{tpu_custom_call.1} parent=23 // pred_check
          %p253 = pneg %p85
        $region30: #{tpu_custom_call.1} parent=23 // pred_check_branch
          %255 = sbr.rel (%p253) target = $region32
        $region31: #{tpu_custom_call.1} parent=23 // pred_region
          %s256 = sand.u32 %s23, 1
          %s257 = scalar_lea.sflag [#allocation6], %s256
          %s258 = sand.u32 %s75, 1
          %s259 = smul.addr %s258, 56
          %s260 = scalar_lea.vmem [#allocation5], %s259
          %s262 = ssub.s32 896, 896
          %263 = vsyncadd %s257, %s262
          %s264 = smul.addr %s31, 7
          %s265 = smul.addr %s30, 7
          %s266 = sadd.s32 %s264, %s265
          %s267 = smul.addr %s266, 128
          %s268 = scalar_lea.hbm %s1, %s267
          %s270 = sshll.u32 %s260, 4
          %s271 = int_to_ptr.vmem [resolvable:$true] %s270
          %273 = dma.hbm_to_vmem [thread:$0]  %s268, 896, %s271, %s257
        $region32: #{tpu_custom_call.1} parent=23 // pred_fallthru
          _
        // Predicated region
        $region33: #{tpu_custom_call.1} parent=23 // pred_check
          %p274 = pneg %p134
        $region34: #{tpu_custom_call.1} parent=23 // pred_check_branch
          %276 = sbr.rel (%p274) target = $region36
        $region35: #{tpu_custom_call.1} parent=23 // pred_region
          %s277 = sand.u32 %s23, 1
          %s278 = scalar_lea.sflag [#allocation9], %s277
          %s279 = sand.u32 %s124, 1
          %s280 = smul.addr %s279, 8
          %s281 = scalar_lea.vmem [#allocation8], %s280
          %s283 = ssub.s32 128, 128
          %284 = vsyncadd %s278, %s283
          %s285 = sadd.s32 %s31, %s30
          %s286 = smul.addr %s285, 128
          %s287 = scalar_lea.hbm %s3, %s286
          %s289 = sshll.u32 %s281, 4
          %s290 = int_to_ptr.vmem [resolvable:$true] %s289
          %292 = dma.hbm_to_vmem [thread:$0]  %s287, 128, %s290, %s278
        $region36: #{tpu_custom_call.1} parent=23 // pred_fallthru
          _
      $region24: #{tpu_custom_call.1} parent=5 // pred_fallthru
        _
      %p293 = scmp.le.s32.totalorder 1, %s23
      %p294 = scmp.lt.s32.totalorder %s23, 3
      %p295 = pnand %p293, %p294
      %p296 = pneg %p295
      // Predicated region
      $region37: #{tpu_custom_call.1} parent=5 // pred_check
        _
      $region38: #{tpu_custom_call.1} parent=5 // pred_check_branch
        %298 = sbr.rel (%p295) target = $region40
      $region39: #{tpu_custom_call.1} parent=5 // pred_region
        %s299 = ssub.s32 %s23, 1
        %s300 = sand.u32 %s50, 1
        %s301 = scalar_lea.sflag [#allocation3], %s300
        %s302 = sand.u32 %s50, 1
        %s303 = smul.addr %s302, 56
        %s304 = scalar_lea.vmem [#allocation2], %s303
        // Predicated region
        $region41: #{tpu_custom_call.1} parent=39 // pred_check
          %p305 = pneg %p63
        $region42: #{tpu_custom_call.1} parent=39 // pred_check_branch
          %307 = sbr.rel (%p305) target = $region44
        $region43: #{tpu_custom_call.1} parent=39 // pred_region
          %308 = dma.done %s301, 896
        $region44: #{tpu_custom_call.1} parent=39 // pred_fallthru
          _
        %s309 = sand.u32 %s28, 1
        %s310 = scalar_lea.sflag [#allocation6], %s309
        %s311 = sand.u32 %s78, 1
        %s312 = smul.addr %s311, 56
        %s313 = scalar_lea.vmem [#allocation5], %s312
        // Predicated region
        $region45: #{tpu_custom_call.1} parent=39 // pred_check
          %p314 = pneg %p91
        $region46: #{tpu_custom_call.1} parent=39 // pred_check_branch
          %316 = sbr.rel (%p314) target = $region48
        $region47: #{tpu_custom_call.1} parent=39 // pred_region
          %317 = dma.done %s310, 896
        $region48: #{tpu_custom_call.1} parent=39 // pred_fallthru
          _
        // Predicated region
        $region49: #{tpu_custom_call.1} parent=39 // pred_check
          %p318 = pneg %p112
        $region50: #{tpu_custom_call.1} parent=39 // pred_check_branch
          %320 = sbr.rel (%p318) target = $region52
        $region51: #{tpu_custom_call.1} parent=39 // pred_region
          %321 = dma.done [#allocation6], 112
        $region52: #{tpu_custom_call.1} parent=39 // pred_fallthru
          _
        %s322 = sand.u32 %s28, 1
        %s323 = scalar_lea.sflag [#allocation9], %s322
        %s324 = sand.u32 %s127, 1
        %s325 = smul.addr %s324, 8
        %s326 = scalar_lea.vmem [#allocation8], %s325
        // Predicated region
        $region53: #{tpu_custom_call.1} parent=39 // pred_check
          %p327 = pneg %p140
        $region54: #{tpu_custom_call.1} parent=39 // pred_check_branch
          %329 = sbr.rel (%p327) target = $region56
        $region55: #{tpu_custom_call.1} parent=39 // pred_region
          %330 = dma.done %s323, 128
        $region56: #{tpu_custom_call.1} parent=39 // pred_fallthru
          _
        // Predicated region
        $region57: #{tpu_custom_call.1} parent=39 // pred_check
          %p331 = pneg %p161
        $region58: #{tpu_custom_call.1} parent=39 // pred_check_branch
          %333 = sbr.rel (%p331) target = $region60
        $region59: #{tpu_custom_call.1} parent=39 // pred_region
          %334 = dma.done [#allocation9], 14336
        $region60: #{tpu_custom_call.1} parent=39 // pred_fallthru
          _
        %s335 = sand.u32 %s50, 1
        %s336 = scalar_lea.sflag [#allocation3], %s335
        %s337 = sand.u32 %s50, 1
        %s338 = smul.addr %s337, 56
        %s339 = scalar_lea.vmem [#allocation2], %s338
        %p340 = pneg %p63
        %p341 = pneg %p60
        %s342 = sand.u32 %s28, 1
        %s343 = scalar_lea.sflag [#allocation6], %s342
        %s344 = sand.u32 %s78, 1
        %s345 = smul.addr %s344, 56
        %s346 = scalar_lea.vmem [#allocation5], %s345
        %p347 = pneg %p91
        %p348 = pneg %p88
        %p349 = pneg %p112
        %p350 = pneg %p109
        %s351 = sand.u32 %s28, 1
        %s352 = scalar_lea.sflag [#allocation9], %s351
        %s353 = sand.u32 %s127, 1
        %s354 = smul.addr %s353, 8
        %s355 = scalar_lea.vmem [#allocation8], %s354
        %p356 = pneg %p140
        %p357 = pneg %p137
        %p358 = pneg %p161
        %p359 = pneg %p158
        %p360 = pneg %p189
        %p361 = pneg %p186
        %s362 = sand.u32 %s176, 1
        %s363 = scalar_lea.sflag [#allocation4], %s362
        %s364 = sand.u32 %s176, 1
        %s365 = smul.addr %s364, 56
        %s366 = scalar_lea.vmem [#allocation11], %s365
        %v367 = vld [vmem:[%s304] sm:$0xff]
        %v368 = vld [vmem:[%s304 + $0x8] sm:$0xff]
        %v369 = vld [vmem:[%s304 + $0x10] sm:$0xff]
        %v370 = vld [vmem:[%s304 + $0x18] sm:$0xff]
        %v371 = vld [vmem:[%s304 + $0x20] sm:$0xff]
        %v372 = vld [vmem:[%s304 + $0x28] sm:$0xff]
        %v373 = vld [vmem:[%s304 + $0x30] sm:$0xff]
        %v374 = vld [vmem:[%s313] sm:$0xff]
        %v375 = vld [vmem:[%s313 + $0x8] sm:$0xff]
        %v376 = vld [vmem:[%s313 + $0x10] sm:$0xff]
        %v377 = vld [vmem:[%s313 + $0x18] sm:$0xff]
        %v378 = vld [vmem:[%s313 + $0x20] sm:$0xff]
        %v379 = vld [vmem:[%s313 + $0x28] sm:$0xff]
        %v380 = vld [vmem:[%s313 + $0x30] sm:$0xff]
        %vm381 = vcmp.ne.f32.partialorder %v374, %v374
        %vm382 = vcmp.ne.f32.partialorder %v375, %v375
        %vm383 = vcmp.ne.f32.partialorder %v376, %v376
        %vm384 = vcmp.ne.f32.partialorder %v377, %v377
        %vm385 = vcmp.ne.f32.partialorder %v378, %v378
        %vm386 = vcmp.ne.f32.partialorder %v379, %v379
        %vm387 = vcmp.ne.f32.partialorder %v380, %v380
        %v388 = vsel %vm381, %v367, %v374
        %v389 = vsel %vm382, %v368, %v375
        %v390 = vsel %vm383, %v369, %v376
        %v391 = vsel %vm384, %v370, %v377
        %v392 = vsel %vm385, %v371, %v378
        %v393 = vsel %vm386, %v372, %v379
        %v394 = vsel %vm387, %v373, %v380
        %v395 = vsub.f32 %v367, %v388
        %v396 = vsub.f32 %v368, %v389
        %v397 = vsub.f32 %v369, %v390
        %v398 = vsub.f32 %v370, %v391
        %v399 = vsub.f32 %v371, %v392
        %v400 = vsub.f32 %v372, %v393
        %v401 = vsub.f32 %v373, %v394
        %v402 = vld [vmem:[#allocation7] sm:$0xff]
        %v404 = vlaneseq
        %v405 = vshrl.u32 %v404, 7
        %v406 = vsub.s32 0, %v405
        %v407 = vrot.slane %v402, %v406
        %v408 = vlaneseq
        %v409 = vshrl.u32 %v408, 7
        %v410 = vsub.s32 1, %v409
        %v411 = vrot.slane %v402, %v410
        %v412 = vlaneseq
        %v413 = vshrl.u32 %v412, 7
        %v414 = vsub.s32 2, %v413
        %v415 = vrot.slane %v402, %v414
        %v416 = vlaneseq
        %v417 = vshrl.u32 %v416, 7
        %v418 = vsub.s32 3, %v417
        %v419 = vrot.slane %v402, %v418
        %v420 = vlaneseq
        %v421 = vshrl.u32 %v420, 7
        %v422 = vsub.s32 4, %v421
        %v423 = vrot.slane %v402, %v422
        %v424 = vlaneseq
        %v425 = vshrl.u32 %v424, 7
        %v426 = vsub.s32 5, %v425
        %v427 = vrot.slane %v402, %v426
        %v428 = vlaneseq
        %v429 = vshrl.u32 %v428, 7
        %v430 = vsub.s32 6, %v429
        %v431 = vrot.slane %v402, %v430
        %v439 = vmul.f32 %v395, %v407
        %v440 = vmul.f32 %v396, %v411
        %v441 = vmul.f32 %v397, %v415
        %v442 = vmul.f32 %v398, %v419
        %v443 = vmul.f32 %v399, %v423
        %v444 = vmul.f32 %v400, %v427
        %v445 = vmul.f32 %v401, %v431
        %v446 = vand.u32 2147483647, %v439
        %v447 = vand.u32 2147483647, %v440
        %v448 = vand.u32 2147483647, %v441
        %v449 = vand.u32 2147483647, %v442
        %v450 = vand.u32 2147483647, %v443
        %v451 = vand.u32 2147483647, %v444
        %v452 = vand.u32 2147483647, %v445
        %v453 = vld [vmem:[%s326] sm:$0xff]
        %v454 = vld [vmem:[#allocation10] sm:$0xff]
        %v455 = vld [vmem:[#allocation10 + $0x8] sm:$0xff]
        %v456 = vld [vmem:[#allocation10 + $0x10] sm:$0xff]
        %v457 = vld [vmem:[#allocation10 + $0x18] sm:$0xff]
        %v458 = vld [vmem:[#allocation10 + $0x20] sm:$0xff]
        %v459 = vld [vmem:[#allocation10 + $0x28] sm:$0xff]
        %v460 = vld [vmem:[#allocation10 + $0x30] sm:$0xff]
        %v461 = vld [vmem:[#allocation10 + $0x38] sm:$0xff]
        %v462 = vld [vmem:[#allocation10 + $0x40] sm:$0xff]
        %v463 = vld [vmem:[#allocation10 + $0x48] sm:$0xff]
        %v464 = vld [vmem:[#allocation10 + $0x50] sm:$0xff]
        %v465 = vld [vmem:[#allocation10 + $0x58] sm:$0xff]
        %v466 = vld [vmem:[#allocation10 + $0x60] sm:$0xff]
        %v467 = vld [vmem:[#allocation10 + $0x68] sm:$0xff]
        %v468 = vld [vmem:[#allocation10 + $0x70] sm:$0xff]
        %v469 = vld [vmem:[#allocation10 + $0x78] sm:$0xff]
        %v470 = vld [vmem:[#allocation10 + $0x80] sm:$0xff]
        %v471 = vld [vmem:[#allocation10 + $0x88] sm:$0xff]
        %v472 = vld [vmem:[#allocation10 + $0x90] sm:$0xff]
        %v473 = vld [vmem:[#allocation10 + $0x98] sm:$0xff]
        %v474 = vld [vmem:[#allocation10 + $0xa0] sm:$0xff]
        %v475 = vld [vmem:[#allocation10 + $0xa8] sm:$0xff]
        %v476 = vld [vmem:[#allocation10 + $0xb0] sm:$0xff]
        %v477 = vld [vmem:[#allocation10 + $0xb8] sm:$0xff]
        %v478 = vld [vmem:[#allocation10 + $0xc0] sm:$0xff]
        %v479 = vld [vmem:[#allocation10 + $0xc8] sm:$0xff]
        %v480 = vld [vmem:[#allocation10 + $0xd0] sm:$0xff]
        %v481 = vld [vmem:[#allocation10 + $0xd8] sm:$0xff]
        %v482 = vld [vmem:[#allocation10 + $0xe0] sm:$0xff]
        %v483 = vld [vmem:[#allocation10 + $0xe8] sm:$0xff]
        %v484 = vld [vmem:[#allocation10 + $0xf0] sm:$0xff]
        %v485 = vld [vmem:[#allocation10 + $0xf8] sm:$0xff]
        %v486 = vld [vmem:[#allocation10 + $0x100] sm:$0xff]
        %v487 = vld [vmem:[#allocation10 + $0x108] sm:$0xff]
        %v488 = vld [vmem:[#allocation10 + $0x110] sm:$0xff]
        %v489 = vld [vmem:[#allocation10 + $0x118] sm:$0xff]
        %v490 = vld [vmem:[#allocation10 + $0x120] sm:$0xff]
        %v491 = vld [vmem:[#allocation10 + $0x128] sm:$0xff]
        %v492 = vld [vmem:[#allocation10 + $0x130] sm:$0xff]
        %v493 = vld [vmem:[#allocation10 + $0x138] sm:$0xff]
        %v494 = vld [vmem:[#allocation10 + $0x140] sm:$0xff]
        %v495 = vld [vmem:[#allocation10 + $0x148] sm:$0xff]
        %v496 = vld [vmem:[#allocation10 + $0x150] sm:$0xff]
        %v497 = vld [vmem:[#allocation10 + $0x158] sm:$0xff]
        %v498 = vld [vmem:[#allocation10 + $0x160] sm:$0xff]
        %v499 = vld [vmem:[#allocation10 + $0x168] sm:$0xff]
        %v500 = vld [vmem:[#allocation10 + $0x170] sm:$0xff]
        %v501 = vld [vmem:[#allocation10 + $0x178] sm:$0xff]
        %v502 = vld [vmem:[#allocation10 + $0x180] sm:$0xff]
        %v503 = vld [vmem:[#allocation10 + $0x188] sm:$0xff]
        %v504 = vld [vmem:[#allocation10 + $0x190] sm:$0xff]
        %v505 = vld [vmem:[#allocation10 + $0x198] sm:$0xff]
        %v506 = vld [vmem:[#allocation10 + $0x1a0] sm:$0xff]
        %v507 = vld [vmem:[#allocation10 + $0x1a8] sm:$0xff]
        %v508 = vld [vmem:[#allocation10 + $0x1b0] sm:$0xff]
        %v509 = vld [vmem:[#allocation10 + $0x1b8] sm:$0xff]
        %v510 = vld [vmem:[#allocation10 + $0x1c0] sm:$0xff]
        %v511 = vld [vmem:[#allocation10 + $0x1c8] sm:$0xff]
        %v512 = vld [vmem:[#allocation10 + $0x1d0] sm:$0xff]
        %v513 = vld [vmem:[#allocation10 + $0x1d8] sm:$0xff]
        %v514 = vld [vmem:[#allocation10 + $0x1e0] sm:$0xff]
        %v515 = vld [vmem:[#allocation10 + $0x1e8] sm:$0xff]
        %v516 = vld [vmem:[#allocation10 + $0x1f0] sm:$0xff]
        %v517 = vld [vmem:[#allocation10 + $0x1f8] sm:$0xff]
        %v518 = vld [vmem:[#allocation10 + $0x200] sm:$0xff]
        %v519 = vld [vmem:[#allocation10 + $0x208] sm:$0xff]
        %v520 = vld [vmem:[#allocation10 + $0x210] sm:$0xff]
        %v521 = vld [vmem:[#allocation10 + $0x218] sm:$0xff]
        %v522 = vld [vmem:[#allocation10 + $0x220] sm:$0xff]
        %v523 = vld [vmem:[#allocation10 + $0x228] sm:$0xff]
        %v524 = vld [vmem:[#allocation10 + $0x230] sm:$0xff]
        %v525 = vld [vmem:[#allocation10 + $0x238] sm:$0xff]
        %v526 = vld [vmem:[#allocation10 + $0x240] sm:$0xff]
        %v527 = vld [vmem:[#allocation10 + $0x248] sm:$0xff]
        %v528 = vld [vmem:[#allocation10 + $0x250] sm:$0xff]
        %v529 = vld [vmem:[#allocation10 + $0x258] sm:$0xff]
        %v530 = vld [vmem:[#allocation10 + $0x260] sm:$0xff]
        %v531 = vld [vmem:[#allocation10 + $0x268] sm:$0xff]
        %v532 = vld [vmem:[#allocation10 + $0x270] sm:$0xff]
        %v533 = vld [vmem:[#allocation10 + $0x278] sm:$0xff]
        %v534 = vld [vmem:[#allocation10 + $0x280] sm:$0xff]
        %v535 = vld [vmem:[#allocation10 + $0x288] sm:$0xff]
        %v536 = vld [vmem:[#allocation10 + $0x290] sm:$0xff]
        %v537 = vld [vmem:[#allocation10 + $0x298] sm:$0xff]
        %v538 = vld [vmem:[#allocation10 + $0x2a0] sm:$0xff]
        %v539 = vld [vmem:[#allocation10 + $0x2a8] sm:$0xff]
        %v540 = vld [vmem:[#allocation10 + $0x2b0] sm:$0xff]
        %v541 = vld [vmem:[#allocation10 + $0x2b8] sm:$0xff]
        %v542 = vld [vmem:[#allocation10 + $0x2c0] sm:$0xff]
        %v543 = vld [vmem:[#allocation10 + $0x2c8] sm:$0xff]
        %v544 = vld [vmem:[#allocation10 + $0x2d0] sm:$0xff]
        %v545 = vld [vmem:[#allocation10 + $0x2d8] sm:$0xff]
        %v546 = vld [vmem:[#allocation10 + $0x2e0] sm:$0xff]
        %v547 = vld [vmem:[#allocation10 + $0x2e8] sm:$0xff]
        %v548 = vld [vmem:[#allocation10 + $0x2f0] sm:$0xff]
        %v549 = vld [vmem:[#allocation10 + $0x2f8] sm:$0xff]
        %v550 = vld [vmem:[#allocation10 + $0x300] sm:$0xff]
        %v551 = vld [vmem:[#allocation10 + $0x308] sm:$0xff]
        %v552 = vld [vmem:[#allocation10 + $0x310] sm:$0xff]
        %v553 = vld [vmem:[#allocation10 + $0x318] sm:$0xff]
        %v554 = vld [vmem:[#allocation10 + $0x320] sm:$0xff]
        %v555 = vld [vmem:[#allocation10 + $0x328] sm:$0xff]
        %v556 = vld [vmem:[#allocation10 + $0x330] sm:$0xff]
        %v557 = vld [vmem:[#allocation10 + $0x338] sm:$0xff]
        %v558 = vld [vmem:[#allocation10 + $0x340] sm:$0xff]
        %v559 = vld [vmem:[#allocation10 + $0x348] sm:$0xff]
        %v560 = vld [vmem:[#allocation10 + $0x350] sm:$0xff]
        %v561 = vld [vmem:[#allocation10 + $0x358] sm:$0xff]
        %v562 = vld [vmem:[#allocation10 + $0x360] sm:$0xff]
        %v563 = vld [vmem:[#allocation10 + $0x368] sm:$0xff]
        %v564 = vld [vmem:[#allocation10 + $0x370] sm:$0xff]
        %v565 = vld [vmem:[#allocation10 + $0x378] sm:$0xff]
        %566 = vmatprep.subr.mxu0 %v560
        %567 = vmatpush1.msra.mxu0 %v559
        %568 = vmatprep.subr.mxu0 %v553
        %569 = vmatpush1.msra.mxu0 %v552
        %570 = vmatprep.subr.mxu0 %v546
        %571 = vmatpush1.msra.mxu0 %v545
        %572 = vmatprep.subr.mxu0 %v539
        %573 = vmatpush1.msra.mxu0 %v538
        %574 = vmatprep.subr.mxu0 %v532
        %575 = vmatpush1.msra.mxu0 %v531
        %576 = vmatprep.subr.mxu0 %v525
        %577 = vmatpush1.msra.mxu0 %v524
        %578 = vmatprep.subr.mxu0 %v518
        %579 = vmatpush1.msra.mxu0 %v517
        %580 = vmatprep.subr.mxu0 %v511
        %581 = vmatpush1.msra.mxu0 %v510
        %582 = vmatprep.subr.mxu0 %v504
        %583 = vmatpush1.msra.mxu0 %v503
        %584 = vmatprep.subr.mxu0 %v497
        %585 = vmatpush1.msra.mxu0 %v496
        %586 = vmatprep.subr.mxu0 %v490
        %587 = vmatpush1.msra.mxu0 %v489
        %588 = vmatprep.subr.mxu0 %v483
        %589 = vmatpush1.msra.mxu0 %v482
        %590 = vmatprep.subr.mxu0 %v476
        %591 = vmatpush1.msra.mxu0 %v475
        %592 = vmatprep.subr.mxu0 %v469
        %593 = vmatpush1.msra.mxu0 %v468
        %594 = vmatprep.subr.mxu0 %v462
        %595 = vmatpush1.msra.mxu0 %v461
        %596 = vmatprep.subr.mxu0 %v455
        %597 = vmatpush1.msra.mxu0 %v454
        %598 = vmatprep.subr.mxu0 0.0
        %599 = vmatpush2.msra.mxu0 0.0
        %600 = vmatprep.subr.mxu0 0.0
        %601 = vmatpush2.msra.mxu0 0.0
        %602 = vmatprep.subr.mxu0 0.0
        %603 = vmatpush2.msra.mxu0 0.0
        %604 = vmatprep.subr.mxu0 0.0
        %605 = vmatpush2.msra.mxu0 0.0
        %606 = vmatprep.subr.mxu0 0.0
        %607 = vmatpush2.msra.mxu0 0.0
        %608 = vmatprep.subr.mxu0 0.0
        %609 = vmatpush2.msra.mxu0 0.0
        %610 = vmatprep.subr.mxu0 0.0
        %611 = vmatpush2.msra.mxu0 0.0
        %612 = vmatprep.subr.mxu0 0.0
        %613 = vmatpush2.msra.mxu0 0.0
        %614 = vmatprep.subr.mxu0 0.0
        %615 = vmatpush2.msra.mxu0 0.0
        %616 = vmatprep.subr.mxu0 0.0
        %617 = vmatpush2.msra.mxu0 0.0
        %618 = vmatprep.subr.mxu0 0.0
        %619 = vmatpush2.msra.mxu0 0.0
        %620 = vmatprep.subr.mxu0 0.0
        %621 = vmatpush2.msra.mxu0 0.0
        %622 = vmatprep.subr.mxu0 0.0
        %623 = vmatpush2.msra.mxu0 0.0
        %624 = vmatprep.subr.mxu0 0.0
        %625 = vmatpush2.msra.mxu0 0.0
        %626 = vmatprep.subr.mxu0 0.0
        %627 = vmatpush2.msra.mxu0 0.0
        %628 = vmatprep.subr.mxu0 0.0
        %629 = vmatpush2.msra.mxu0 0.0
        %630 = vmatprep.mubr.f32.mxu0 0.0
        %631 = vmatmul.mubr.f32.gmra.mxu0 %v453
        %v632 = vpop.f32.mrf.mxu0
        %v633 = vadd.f32 0.0, %v632
        %v634 = vpop.f32.mrf.mxu0
        %v635 = vadd.f32 0.0, %v634
        %636 = vdwg.mxu0
        %637 = vmatprep.subr.mxu0 %v562
        %638 = vmatpush1.msra.mxu0 %v561
        %639 = vmatprep.subr.mxu0 %v555
        %640 = vmatpush1.msra.mxu0 %v554
        %641 = vmatprep.subr.mxu0 %v548
        %642 = vmatpush1.msra.mxu0 %v547
        %643 = vmatprep.subr.mxu0 %v541
        %644 = vmatpush1.msra.mxu0 %v540
        %645 = vmatprep.subr.mxu0 %v534
        %646 = vmatpush1.msra.mxu0 %v533
        %647 = vmatprep.subr.mxu0 %v527
        %648 = vmatpush1.msra.mxu0 %v526
        %649 = vmatprep.subr.mxu0 %v520
        %650 = vmatpush1.msra.mxu0 %v519
        %651 = vmatprep.subr.mxu0 %v513
        %652 = vmatpush1.msra.mxu0 %v512
        %653 = vmatprep.subr.mxu0 %v506
        %654 = vmatpush1.msra.mxu0 %v505
        %655 = vmatprep.subr.mxu0 %v499
        %656 = vmatpush1.msra.mxu0 %v498
        %657 = vmatprep.subr.mxu0 %v492
        %658 = vmatpush1.msra.mxu0 %v491
        %659 = vmatprep.subr.mxu0 %v485
        %660 = vmatpush1.msra.mxu0 %v484
        %661 = vmatprep.subr.mxu0 %v478
        %662 = vmatpush1.msra.mxu0 %v477
        %663 = vmatprep.subr.mxu0 %v471
        %664 = vmatpush1.msra.mxu0 %v470
        %665 = vmatprep.subr.mxu0 %v464
        %666 = vmatpush1.msra.mxu0 %v463
        %667 = vmatprep.subr.mxu0 %v457
        %668 = vmatpush1.msra.mxu0 %v456
        %669 = vmatprep.subr.mxu0 0.0
        %670 = vmatpush2.msra.mxu0 0.0
        %671 = vmatprep.subr.mxu0 0.0
        %672 = vmatpush2.msra.mxu0 0.0
        %673 = vmatprep.subr.mxu0 0.0
        %674 = vmatpush2.msra.mxu0 0.0
        %675 = vmatprep.subr.mxu0 0.0
        %676 = vmatpush2.msra.mxu0 0.0
        %677 = vmatprep.subr.mxu0 0.0
        %678 = vmatpush2.msra.mxu0 0.0
        %679 = vmatprep.subr.mxu0 0.0
        %680 = vmatpush2.msra.mxu0 0.0
        %681 = vmatprep.subr.mxu0 0.0
        %682 = vmatpush2.msra.mxu0 0.0
        %683 = vmatprep.subr.mxu0 0.0
        %684 = vmatpush2.msra.mxu0 0.0
        %685 = vmatprep.subr.mxu0 0.0
        %686 = vmatpush2.msra.mxu0 0.0
        %687 = vmatprep.subr.mxu0 0.0
        %688 = vmatpush2.msra.mxu0 0.0
        %689 = vmatprep.subr.mxu0 0.0
        %690 = vmatpush2.msra.mxu0 0.0
        %691 = vmatprep.subr.mxu0 0.0
        %692 = vmatpush2.msra.mxu0 0.0
        %693 = vmatprep.subr.mxu0 0.0
        %694 = vmatpush2.msra.mxu0 0.0
        %695 = vmatprep.subr.mxu0 0.0
        %696 = vmatpush2.msra.mxu0 0.0
        %697 = vmatprep.subr.mxu0 0.0
        %698 = vmatpush2.msra.mxu0 0.0
        %699 = vmatprep.subr.mxu0 0.0
        %700 = vmatpush2.msra.mxu0 0.0
        %701 = vmatprep.mubr.f32.mxu0 0.0
        %702 = vmatmul.mubr.f32.gmra.mxu0 %v453
        %v703 = vpop.f32.mrf.mxu0
        %v704 = vadd.f32 0.0, %v703
        %v705 = vpop.f32.mrf.mxu0
        %v706 = vadd.f32 0.0, %v705
        %707 = vdwg.mxu0
        %708 = vmatprep.subr.mxu0 %v564
        %709 = vmatpush1.msra.mxu0 %v563
        %710 = vmatprep.subr.mxu0 %v557
        %711 = vmatpush1.msra.mxu0 %v556
        %712 = vmatprep.subr.mxu0 %v550
        %713 = vmatpush1.msra.mxu0 %v549
        %714 = vmatprep.subr.mxu0 %v543
        %715 = vmatpush1.msra.mxu0 %v542
        %716 = vmatprep.subr.mxu0 %v536
        %717 = vmatpush1.msra.mxu0 %v535
        %718 = vmatprep.subr.mxu0 %v529
        %719 = vmatpush1.msra.mxu0 %v528
        %720 = vmatprep.subr.mxu0 %v522
        %721 = vmatpush1.msra.mxu0 %v521
        %722 = vmatprep.subr.mxu0 %v515
        %723 = vmatpush1.msra.mxu0 %v514
        %724 = vmatprep.subr.mxu0 %v508
        %725 = vmatpush1.msra.mxu0 %v507
        %726 = vmatprep.subr.mxu0 %v501
        %727 = vmatpush1.msra.mxu0 %v500
        %728 = vmatprep.subr.mxu0 %v494
        %729 = vmatpush1.msra.mxu0 %v493
        %730 = vmatprep.subr.mxu0 %v487
        %731 = vmatpush1.msra.mxu0 %v486
        %732 = vmatprep.subr.mxu0 %v480
        %733 = vmatpush1.msra.mxu0 %v479
        %734 = vmatprep.subr.mxu0 %v473
        %735 = vmatpush1.msra.mxu0 %v472
        %736 = vmatprep.subr.mxu0 %v466
        %737 = vmatpush1.msra.mxu0 %v465
        %738 = vmatprep.subr.mxu0 %v459
        %739 = vmatpush1.msra.mxu0 %v458
        %740 = vmatprep.subr.mxu0 0.0
        %741 = vmatpush2.msra.mxu0 0.0
        %742 = vmatprep.subr.mxu0 0.0
        %743 = vmatpush2.msra.mxu0 0.0
        %744 = vmatprep.subr.mxu0 0.0
        %745 = vmatpush2.msra.mxu0 0.0
        %746 = vmatprep.subr.mxu0 0.0
        %747 = vmatpush2.msra.mxu0 0.0
        %748 = vmatprep.subr.mxu0 0.0
        %749 = vmatpush2.msra.mxu0 0.0
        %750 = vmatprep.subr.mxu0 0.0
        %751 = vmatpush2.msra.mxu0 0.0
        %752 = vmatprep.subr.mxu0 0.0
        %753 = vmatpush2.msra.mxu0 0.0
        %754 = vmatprep.subr.mxu0 0.0
        %755 = vmatpush2.msra.mxu0 0.0
        %756 = vmatprep.subr.mxu0 0.0
        %757 = vmatpush2.msra.mxu0 0.0
        %758 = vmatprep.subr.mxu0 0.0
        %759 = vmatpush2.msra.mxu0 0.0
        %760 = vmatprep.subr.mxu0 0.0
        %761 = vmatpush2.msra.mxu0 0.0
        %762 = vmatprep.subr.mxu0 0.0
        %763 = vmatpush2.msra.mxu0 0.0
        %764 = vmatprep.subr.mxu0 0.0
        %765 = vmatpush2.msra.mxu0 0.0
        %766 = vmatprep.subr.mxu0 0.0
        %767 = vmatpush2.msra.mxu0 0.0
        %768 = vmatprep.subr.mxu0 0.0
        %769 = vmatpush2.msra.mxu0 0.0
        %770 = vmatprep.subr.mxu0 0.0
        %771 = vmatpush2.msra.mxu0 0.0
        %772 = vmatprep.mubr.f32.mxu0 0.0
        %773 = vmatmul.mubr.f32.gmra.mxu0 %v453
        %v774 = vpop.f32.mrf.mxu0
        %v775 = vadd.f32 0.0, %v774
        %v776 = vpop.f32.mrf.mxu0
        %v777 = vadd.f32 0.0, %v776
        %778 = vdwg.mxu0
        %779 = vmatprep.subr.mxu0 0.0
        %780 = vmatpush1.msra.mxu0 %v565
        %781 = vmatprep.subr.mxu0 0.0
        %782 = vmatpush1.msra.mxu0 %v558
        %783 = vmatprep.subr.mxu0 0.0
        %784 = vmatpush1.msra.mxu0 %v551
        %785 = vmatprep.subr.mxu0 0.0
        %786 = vmatpush1.msra.mxu0 %v544
        %787 = vmatprep.subr.mxu0 0.0
        %788 = vmatpush1.msra.mxu0 %v537
        %789 = vmatprep.subr.mxu0 0.0
        %790 = vmatpush1.msra.mxu0 %v530
        %791 = vmatprep.subr.mxu0 0.0
        %792 = vmatpush1.msra.mxu0 %v523
        %793 = vmatprep.subr.mxu0 0.0
        %794 = vmatpush1.msra.mxu0 %v516
        %795 = vmatprep.subr.mxu0 0.0
        %796 = vmatpush1.msra.mxu0 %v509
        %797 = vmatprep.subr.mxu0 0.0
        %798 = vmatpush1.msra.mxu0 %v502
        %799 = vmatprep.subr.mxu0 0.0
        %800 = vmatpush1.msra.mxu0 %v495
        %801 = vmatprep.subr.mxu0 0.0
        %802 = vmatpush1.msra.mxu0 %v488
        %803 = vmatprep.subr.mxu0 0.0
        %804 = vmatpush1.msra.mxu0 %v481
        %805 = vmatprep.subr.mxu0 0.0
        %806 = vmatpush1.msra.mxu0 %v474
        %807 = vmatprep.subr.mxu0 0.0
        %808 = vmatpush1.msra.mxu0 %v467
        %809 = vmatprep.subr.mxu0 0.0
        %810 = vmatpush1.msra.mxu0 %v460
        %811 = vmatprep.subr.mxu0 0.0
        %812 = vmatpush2.msra.mxu0 0.0
        %813 = vmatprep.subr.mxu0 0.0
        %814 = vmatpush2.msra.mxu0 0.0
        %815 = vmatprep.subr.mxu0 0.0
        %816 = vmatpush2.msra.mxu0 0.0
        %817 = vmatprep.subr.mxu0 0.0
        %818 = vmatpush2.msra.mxu0 0.0
        %819 = vmatprep.subr.mxu0 0.0
        %820 = vmatpush2.msra.mxu0 0.0
        %821 = vmatprep.subr.mxu0 0.0
        %822 = vmatpush2.msra.mxu0 0.0
        %823 = vmatprep.subr.mxu0 0.0
        %824 = vmatpush2.msra.mxu0 0.0
        %825 = vmatprep.subr.mxu0 0.0
        %826 = vmatpush2.msra.mxu0 0.0
        %827 = vmatprep.subr.mxu0 0.0
        %828 = vmatpush2.msra.mxu0 0.0
        %829 = vmatprep.subr.mxu0 0.0
        %830 = vmatpush2.msra.mxu0 0.0
        %831 = vmatprep.subr.mxu0 0.0
        %832 = vmatpush2.msra.mxu0 0.0
        %833 = vmatprep.subr.mxu0 0.0
        %834 = vmatpush2.msra.mxu0 0.0
        %835 = vmatprep.subr.mxu0 0.0
        %836 = vmatpush2.msra.mxu0 0.0
        %837 = vmatprep.subr.mxu0 0.0
        %838 = vmatpush2.msra.mxu0 0.0
        %839 = vmatprep.subr.mxu0 0.0
        %840 = vmatpush2.msra.mxu0 0.0
        %841 = vmatprep.subr.mxu0 0.0
        %842 = vmatpush2.msra.mxu0 0.0
        %843 = vmatprep.mubr.f32.mxu0 0.0
        %844 = vmatmul.mubr.f32.gmra.mxu0 %v453
        %v845 = vpop.f32.mrf.mxu0
        %v846 = vadd.f32 0.0, %v845
        %v847 = vpop.f32.mrf.mxu0
        %848 = vdwg.mxu0
        %v849 = vmul.f32 %v446, %v633
        %v850 = vmul.f32 %v447, %v635
        %v851 = vmul.f32 %v448, %v704
        %v852 = vmul.f32 %v449, %v706
        %v853 = vmul.f32 %v450, %v775
        %v854 = vmul.f32 %v451, %v777
        %v855 = vmul.f32 %v452, %v846
        %856 = vst [vmem:[%s366] sm:$0xff] %v849
        %857 = vst [vmem:[%s366 + $0x8] sm:$0xff] %v850
        %858 = vst [vmem:[%s366 + $0x10] sm:$0xff] %v851
        %859 = vst [vmem:[%s366 + $0x18] sm:$0xff] %v852
        %860 = vst [vmem:[%s366 + $0x20] sm:$0xff] %v853
        %861 = vst [vmem:[%s366 + $0x28] sm:$0xff] %v854
        %862 = vst [vmem:[%s366 + $0x30] sm:$0xff] %v855
        %s863 = sand.u32 %s176, 1
        %s864 = scalar_lea.sflag [#allocation4], %s863
        %s865 = sand.u32 %s176, 1
        %s866 = smul.addr %s865, 56
        %s867 = scalar_lea.vmem [#allocation11], %s866
        // Predicated region
        $region61: #{tpu_custom_call.1} parent=39 // pred_check
          %p868 = pneg %p186
        $region62: #{tpu_custom_call.1} parent=39 // pred_check_branch
          %870 = sbr.rel (%p868) target = $region64
        $region63: #{tpu_custom_call.1} parent=39 // pred_region
          %s872 = ssub.s32 896, 896
          %873 = vsyncadd %s864, %s872
          %s874 = smul.addr %s33, 7
          %s875 = smul.addr %s32, 7
          %s876 = sadd.s32 %s874, %s875
          %s877 = smul.addr %s876, 128
          %s878 = scalar_lea.hbm %s5, %s877
          %s880 = sshll.u32 %s867, 4
          %s881 = int_to_ptr.vmem [resolvable:$true] %s880
          %883 = dma.vmem_to_hbm [thread:$0]  %s881, 896, %s878, %s864
        $region64: #{tpu_custom_call.1} parent=39 // pred_fallthru
          _
      $region40: #{tpu_custom_call.1} parent=5 // pred_fallthru
        _
      %p884 = scmp.le.s32.totalorder 2, %s23
      // Predicated region
      $region65: #{tpu_custom_call.1} parent=5 // pred_check
        %p885 = pneg %p884
      $region66: #{tpu_custom_call.1} parent=5 // pred_check_branch
        %887 = sbr.rel (%p885) target = $region68
      $region67: #{tpu_custom_call.1} parent=5 // pred_region
        %s888 = ssub.s32 %s23, 2
        // Predicated region
        $region69: #{tpu_custom_call.1} parent=67 // pred_check
          %p889 = pneg %p192
        $region70: #{tpu_custom_call.1} parent=67 // pred_check_branch
          %891 = sbr.rel (%p889) target = $region72
        $region71: #{tpu_custom_call.1} parent=67 // pred_region
          %s892 = sand.u32 %s177, 1
          %s893 = scalar_lea.sflag [#allocation4], %s892
          %s894 = sand.u32 %s177, 1
          %s895 = smul.addr %s894, 56
          %s896 = scalar_lea.vmem [#allocation11], %s895
          %897 = dma.done %s893, 896
        $region72: #{tpu_custom_call.1} parent=67 // pred_fallthru
          _
      $region68: #{tpu_custom_call.1} parent=5 // pred_fallthru
        _
    $region6: #{tpu_custom_call.1} parent=1 // loop_footer
      %s27 = sadd.s32 1, %s23
    $region7: #{tpu_custom_call.1} parent=1 // loop_footer_branch
      %22 = sbr.rel target = $region3
    $region8: #{tpu_custom_call.1} parent=1 // loop_exit
      _
    %898 = vsyncpa [#allocation3], 1
    %s899 = scalar_lea.sflag [#allocation3], 1
    %900 = vsyncpa %s899, 1
    %901 = vsyncpa [#allocation6], 1
    %s902 = scalar_lea.sflag [#allocation6], 1
    %903 = vsyncpa %s902, 1
    %904 = vsyncpa [#allocation9], 1
    %s905 = scalar_lea.sflag [#allocation9], 1
    %906 = vsyncpa %s905, 1
    %907 = vsyncpa [#allocation4], 1
    %s908 = scalar_lea.sflag [#allocation4], 1
    %909 = vsyncpa %s908, 1

</llo_original>
